<compile_context>
chip_gen: v6e
topology: v6e:2x2x1
jax: 0.10.0
libtpu: 0.0.40
codegen_flags: <defaults>
</compile_context>

<pallas_src>
import functools

import jax
import jax.numpy as jnp
from jax.experimental import pallas as pl
from jax.experimental.pallas import tpu as pltpu


def _round_up(x, m):
    return ((x + m - 1) // m) * m


def _group_pool_kernel(x_ref, o_ref, acc_ref, *, inv_l):
    """Accumulate one (row_tile, l_tile) chunk of the (rows, L) mean."""
    k = pl.program_id(1)

    @pl.when(k == 0)
    def _init():
        acc_ref[...] = jnp.zeros_like(acc_ref)

    # Steady state: elementwise f32 accumulate (vld + vadd only, no XLU work).
    acc_ref[...] += x_ref[...].astype(jnp.float32)

    @pl.when(k == pl.num_programs(1) - 1)
    def _finalize():
        # One cross-lane reduce per output row tile, then scale by 1/L.
        total = jnp.sum(acc_ref[...], axis=-1, keepdims=True)   # (row_tile, 1)
        mean = total * inv_l
        # Lane-dense store (unmasked vst); wrapper takes lane 0.
        o_ref[...] = jnp.broadcast_to(mean, o_ref.shape).astype(o_ref.dtype)


def group_pooling(x, dim_rep, num_rep, *, row_tile=None, l_tile=None):
    """GroupPooling forward: x (B, num_rep*dim_rep, H, W) -> (B, num_rep, 1, 1)."""
    B, C, H, W = x.shape
    assert C == num_rep * dim_rep, "channel dim must equal num_rep * dim_rep"
    R = B * num_rep            # independent output rows
    L = dim_rep * H * W        # reduction length per row

    # --- tile sizes (kept small enough for v7x 64 MiB / v5e 16 MiB scoped) ---
    if row_tile is None:
        row_tile = min(64, _round_up(R, 8))        # sublane-full row tiles
    row_tile = _round_up(row_tile, 8)
    if l_tile is None:
        l_tile = min(4096, _round_up(L, 128))      # lane-multiple L chunks
    l_tile = _round_up(l_tile, 128)

    R_pad = _round_up(R, row_tile)
    L_pad = _round_up(L, l_tile)

    # --- layout glue: NCHW -> zero-padded (R_pad, L_pad); divide by true L ---
    x2 = x.reshape(R, L)
    if R_pad != R or L_pad != L:
        x2 = jnp.pad(x2, ((0, R_pad - R), (0, L_pad - L)))

    grid = (R_pad // row_tile, L_pad // l_tile)
    itemsize = jnp.dtype(x.dtype).itemsize

    out = pl.pallas_call(
        functools.partial(_group_pool_kernel, inv_l=1.0 / float(L)),
        out_shape=jax.ShapeDtypeStruct((R_pad, 128), x.dtype),
        grid_spec=pltpu.PrefetchScalarGridSpec(
            num_scalar_prefetch=0,
            grid=grid,
            in_specs=[pl.BlockSpec((row_tile, l_tile), lambda r, k: (r, k))],
            out_specs=pl.BlockSpec((row_tile, 128), lambda r, k: (r, 0)),
            scratch_shapes=[pltpu.VMEM((row_tile, l_tile), jnp.float32)],
        ),
        compiler_params=pltpu.CompilerParams(
            dimension_semantics=("parallel", "arbitrary"),
        ),
        cost_estimate=pl.CostEstimate(
            flops=R_pad * L_pad,
            transcendentals=0,
            bytes_accessed=R_pad * L_pad * itemsize + R_pad * 128 * itemsize,
        ),
    )(x2)

    return out[:R, 0].reshape(B, num_rep, 1, 1)


def _ref(x, dim_rep, num_rep):
    B, C, H, W = x.shape
    return jnp.mean(
        x.reshape(B, num_rep, dim_rep, H, W), axis=(2, 3, 4)
    ).reshape(B, num_rep, 1, 1)


if __name__ == "__main__":
    key = jax.random.PRNGKey(0)

    # Case 1: default tiles (single L chunk), small shapes.
    B, num_rep, dim_rep, H, W = 2, 4, 2, 16, 16
    x1 = jax.random.normal(key, (B, num_rep * dim_rep, H, W), dtype=jnp.float32)
    y1 = jax.block_until_ready(group_pooling(x1, dim_rep=dim_rep, num_rep=num_rep))
    assert y1.shape == (B, num_rep, 1, 1)
    assert jnp.allclose(y1, _ref(x1, dim_rep, num_rep), atol=1e-5, rtol=1e-5)

    # Case 2: forces row padding, L padding, and a multi-chunk reduction.
    B2, num_rep2, dim_rep2, H2, W2 = 1, 3, 3, 7, 7
    x2 = jax.random.normal(
        jax.random.PRNGKey(0), (B2, num_rep2 * dim_rep2, H2, W2), dtype=jnp.float32
    )
    y2 = jax.block_until_ready(
        group_pooling(x2, dim_rep=dim_rep2, num_rep=num_rep2, l_tile=128)
    )
    assert y2.shape == (B2, num_rep2, 1, 1)
    assert jnp.allclose(y2, _ref(x2, dim_rep2, num_rep2), atol=1e-5, rtol=1e-5)

    print("KERNEL_OK")
</pallas_src>

<mosaic_0001>
module attributes {stable_mosaic.version = 11 : i64} {
  func.func @_group_pool_kernel(%arg0: i32, %arg1: i32, %arg2: memref<8x512xf32, #tpu.memory_space<vmem>>, %arg3: memref<8x128xf32, #tpu.memory_space<vmem>>, %arg4: memref<8x512xf32, #tpu.memory_space<vmem>>) attributes {dimension_semantics = [#tpu.dimension_semantics<parallel>, #tpu.dimension_semantics<arbitrary>], iteration_bounds = array<i64: 1, 1>, scalar_prefetch = 0 : i64, scratch_operands = 1 : i64, tpu.core_type = #tpu.core_type<tc>, window_params = [{transform_indices = @transform_0, window_bounds = array<i64: 8, 512>}, {transform_indices = @transform_1, window_bounds = array<i64: 8, 128>}]} {
    %c0_i32 = arith.constant 0 : i32
    %0 = arith.cmpi eq, %arg1, %c0_i32 : i32
    %1 = arith.extui %0 : i1 to i32
    %c0_i32_0 = arith.constant 0 : i32
    %2 = arith.cmpi ne, %1, %c0_i32_0 : i32
    scf.if %2 {
      %cst = arith.constant 0.000000e+00 : f32
      %10 = vector.broadcast %cst : f32 to vector<8x512xf32>
      %c0_8 = arith.constant 0 : index
      %c0_9 = arith.constant 0 : index
      %11 = vector.load %arg4[%c0_8, %c0_9] : memref<8x512xf32, #tpu.memory_space<vmem>>, vector<8x512xf32>
      tpu.vector_store %arg4[%c0_8, %c0_9], %10 {strides = array<i32>} : memref<8x512xf32, #tpu.memory_space<vmem>>, vector<8x512xf32>,
    } else {
    }
    %c0 = arith.constant 0 : index
    %c0_1 = arith.constant 0 : index
    %3 = vector.load %arg4[%c0, %c0_1] : memref<8x512xf32, #tpu.memory_space<vmem>>, vector<8x512xf32>
    %c0_2 = arith.constant 0 : index
    %c0_3 = arith.constant 0 : index
    %4 = vector.load %arg2[%c0_2, %c0_3] : memref<8x512xf32, #tpu.memory_space<vmem>>, vector<8x512xf32>
    %5 = arith.addf %3, %4 : vector<8x512xf32>
    %c0_4 = arith.constant 0 : index
    %c0_5 = arith.constant 0 : index
    %6 = vector.load %arg4[%c0_4, %c0_5] : memref<8x512xf32, #tpu.memory_space<vmem>>, vector<8x512xf32>
    tpu.vector_store %arg4[%c0_4, %c0_5], %5 {strides = array<i32>} : memref<8x512xf32, #tpu.memory_space<vmem>>, vector<8x512xf32>,
    %c0_i32_6 = arith.constant 0 : i32
    %7 = arith.cmpi eq, %arg1, %c0_i32_6 : i32
    %8 = arith.extui %7 : i1 to i32
    %c0_i32_7 = arith.constant 0 : i32
    %9 = arith.cmpi ne, %8, %c0_i32_7 : i32
    scf.if %9 {
      %c0_8 = arith.constant 0 : index
      %c0_9 = arith.constant 0 : index
      %10 = vector.load %arg4[%c0_8, %c0_9] : memref<8x512xf32, #tpu.memory_space<vmem>>, vector<8x512xf32>
      %cst = arith.constant dense<0.000000e+00> : vector<8xf32>
      %11 = vector.multi_reduction <add>, %10, %cst [1] : vector<8x512xf32> to vector<8xf32>
      %12 = vector.shape_cast %11 : vector<8xf32> to vector<8x1xf32>
      %cst_10 = arith.constant 0.001953125 : f32
      %13 = vector.broadcast %cst_10 : f32 to vector<8x1xf32>
      %14 = arith.mulf %12, %13 : vector<8x1xf32>
      %15 = vector.shape_cast %14 : vector<8x1xf32> to vector<8x1xf32>
      %16 = vector.broadcast %15 : vector<8x1xf32> to vector<8x128xf32>
      %c0_11 = arith.constant 0 : index
      %c0_12 = arith.constant 0 : index
      %17 = vector.load %arg3[%c0_11, %c0_12] : memref<8x128xf32, #tpu.memory_space<vmem>>, vector<8x128xf32>
      tpu.vector_store %arg3[%c0_11, %c0_12], %16 {strides = array<i32>} : memref<8x128xf32, #tpu.memory_space<vmem>>, vector<8x128xf32>,
    } else {
    }
    return
  }
  func.func @transform_0(%arg0: i32, %arg1: i32) -> (i32, i32) {
    %c0_i32 = arith.constant 0 : i32
    return %arg0, %arg1 : i32, i32
  }
  func.func @transform_1(%arg0: i32, %arg1: i32) -> (i32, i32) {
    %c0_i32 = arith.constant 0 : i32
    %c0_i32_0 = arith.constant 0 : i32
    return %arg0, %c0_i32 : i32, i32
  }
}

</mosaic_0001>

<llo_original>
// kernel: tpu_custom_call.1
$region0: #{tpu_custom_call.1}
  #allocation0 [shape = 'u32[]', space=smem, size = 0x4, offset = 0x4, fixed_abs, tag = 'smem constant byte address 0x4 - core index']
  #allocation1 [shape = 'u32[144,128]{1,0:T(1,128)}', space=vmem, size = 0x12000, scoped, tag = 'internal scratch']
  #allocation2 [shape = 'f32[8,512]{1,0:T(8,128)}', space=vmem, size = 0x4000, scoped, tag = 'scratch operand']
  %s0 = inlined_call_operand.hbm [shape: f32[8,512], index: 0, kind: input, shape index: {}]
  %s1 = inlined_call_operand.hbm [shape: f32[8,128], index: 1, kind: output, shape index: {}]
  %s2 = sld [smem:[#allocation0]]
  $region26: #{tpu_custom_call.1} parent=0
    _
  %s4 = ssub.s32 1, %s2
  %s5 = scalar_select 0, %s4, %s2
  $region1: #{tpu_custom_call.1} parent=0
    #allocation3 [shape = 'u8[16384]{0}', space=vmem, size = 0x4000, scoped, tag = 'input window, operand 0, single buffered']
    #allocation4 [shape = 's32[1]{0}', space=sflag, size = 0x4, scoped, tag = 'scoped memory for tpu_custom_call.1']
    #allocation5 [shape = 's32[1]{0}', space=sflag, size = 0x4, scoped, tag = 'scoped memory for tpu_custom_call.1']
    #allocation6 [shape = 'u8[4096]{0}', space=vmem, size = 0x1000, scoped, tag = 'output window, operand 0, single buffered']
    %6 = vsyncpa [#allocation4], 0
    %7 = vsyncpa [#allocation5], 0
    // Predicated region
    $region2: #{tpu_custom_call.1} parent=1 // pred_check
      _
    $region3: #{tpu_custom_call.1} parent=1 // pred_check_branch
      %9 = sbr.rel (0) target = $region5
    $region4: #{tpu_custom_call.1} parent=1 // pred_region
      %s11 = ssub.s32 512, 512
      %12 = vsyncadd [#allocation4], %s11
      %s14 = sshll.u32 [#allocation3], 4
      %s15 = int_to_ptr.vmem [resolvable:$true] %s14
      %17 = dma.hbm_to_vmem [thread:$0]  %s0, 512, %s15, [#allocation4]
    $region5: #{tpu_custom_call.1} parent=1 // pred_fallthru
      _
    // Predicated region
    $region6: #{tpu_custom_call.1} parent=1 // pred_check
      _
    $region7: #{tpu_custom_call.1} parent=1 // pred_check_branch
      %19 = sbr.rel (0) target = $region9
    $region8: #{tpu_custom_call.1} parent=1 // pred_region
      %20 = dma.done [#allocation4], 512
    $region9: #{tpu_custom_call.1} parent=1 // pred_fallthru
      _
    %p21 = scmp.eq.s32.totalorder 0, 0
    // Predicated region
    $region10: #{tpu_custom_call.1} parent=1 // pred_check
      %p22 = pneg %p21
    $region11: #{tpu_custom_call.1} parent=1 // pred_check_branch
      %24 = sbr.rel (%p22) target = $region13
    $region12: #{tpu_custom_call.1} parent=1 // pred_region
      %25 = vst [vmem:[#allocation2] sm:$0xff] 0.0
      %26 = vst [vmem:[#allocation2 + $0x8] sm:$0xff] 0.0
      %27 = vst [vmem:[#allocation2 + $0x10] sm:$0xff] 0.0
      %28 = vst [vmem:[#allocation2 + $0x18] sm:$0xff] 0.0
    $region13: #{tpu_custom_call.1} parent=1 // pred_fallthru
      _
    %v29 = vld [vmem:[#allocation2] sm:$0xff]
    %v30 = vld [vmem:[#allocation2 + $0x8] sm:$0xff]
    %v31 = vld [vmem:[#allocation2 + $0x10] sm:$0xff]
    %v32 = vld [vmem:[#allocation2 + $0x18] sm:$0xff]
    %v33 = vld [vmem:[#allocation3] sm:$0xff]
    %v34 = vld [vmem:[#allocation3 + $0x8] sm:$0xff]
    %v35 = vld [vmem:[#allocation3 + $0x10] sm:$0xff]
    %v36 = vld [vmem:[#allocation3 + $0x18] sm:$0xff]
    %v37 = vadd.f32 %v29, %v33
    %v38 = vadd.f32 %v30, %v34
    %v39 = vadd.f32 %v31, %v35
    %v40 = vadd.f32 %v32, %v36
    %41 = vst [vmem:[#allocation2] sm:$0xff] %v37
    %42 = vst [vmem:[#allocation2 + $0x8] sm:$0xff] %v38
    %43 = vst [vmem:[#allocation2 + $0x10] sm:$0xff] %v39
    %44 = vst [vmem:[#allocation2 + $0x18] sm:$0xff] %v40
    // Predicated region
    $region14: #{tpu_custom_call.1} parent=1 // pred_check
      %p45 = pneg %p21
    $region15: #{tpu_custom_call.1} parent=1 // pred_check_branch
      %47 = sbr.rel (%p45) target = $region17
    $region16: #{tpu_custom_call.1} parent=1 // pred_region
      %v48 = vld [vmem:[#allocation2] sm:$0xff]
      %v49 = vld [vmem:[#allocation2 + $0x8] sm:$0xff]
      %v50 = vld [vmem:[#allocation2 + $0x10] sm:$0xff]
      %v51 = vld [vmem:[#allocation2 + $0x18] sm:$0xff]
      %v52 = vadd.f32 %v48, %v49
      %v53 = vadd.f32 %v52, %v50
      %v54 = vadd.f32 %v53, %v51
      %55 = vadd.xlane.f32.xlu0 %v54
      %v56 = vpop.xlane.xlu0 %55
      %v57 = vmul.f32 %v56, 0.001953125
      %58 = vst [vmem:[#allocation6] sm:$0xff] %v57
    $region17: #{tpu_custom_call.1} parent=1 // pred_fallthru
      _
    // Predicated region
    $region18: #{tpu_custom_call.1} parent=1 // pred_check
      _
    $region19: #{tpu_custom_call.1} parent=1 // pred_check_branch
      %60 = sbr.rel (0) target = $region21
    $region20: #{tpu_custom_call.1} parent=1 // pred_region
      %s62 = ssub.s32 128, 128
      %63 = vsyncadd [#allocation5], %s62
      %s65 = sshll.u32 [#allocation6], 4
      %s66 = int_to_ptr.vmem [resolvable:$true] %s65
      %68 = dma.vmem_to_hbm [thread:$0]  %s66, 128, %s1, [#allocation5]
    $region21: #{tpu_custom_call.1} parent=1 // pred_fallthru
      _
    // Predicated region
    $region22: #{tpu_custom_call.1} parent=1 // pred_check
      _
    $region23: #{tpu_custom_call.1} parent=1 // pred_check_branch
      %70 = sbr.rel (0) target = $region25
    $region24: #{tpu_custom_call.1} parent=1 // pred_region
      %71 = dma.done [#allocation5], 128
    $region25: #{tpu_custom_call.1} parent=1 // pred_fallthru
      _
    %72 = vsyncpa [#allocation4], 1
    %73 = vsyncpa [#allocation5], 1

</llo_original>
